<compile_context>
chip_gen: v7x
topology: tpu7x:2x2x1
jax: 0.10.0
libtpu: 0.0.40
codegen_flags: <defaults>
</compile_context>

<pallas_src>
import jax
import jax.numpy as jnp
from jax.experimental import pallas as pl
from jax.experimental.pallas import tpu as pltpu


def _cast_f32_kernel(x_ref, o_ref):
    # Elementwise cast of the whole VMEM tile to float32.
    o_ref[...] = x_ref[...].astype(jnp.float32)


def _pick_lane(n):
    """Widest lane width (multiple of 128) that divides n; else 128 + pad."""
    for lane in (1024, 512, 256, 128):
        if n % lane == 0:
            return lane, False
    return 128, True


def _cast_2d(x2d):
    rows, lane = x2d.shape

    # ~2 MiB of f32 output per grid step; amortizes the ~0.35 us per-step cost.
    target_out_bytes = 2 * 1024 * 1024
    target_rows = max(8, target_out_bytes // (lane * 4))
    if target_rows >= rows:
        br = rows  # single (possibly small) block == full extent
    else:
        # Multiple of 32 keeps the packed (u)int8 / bf16 input tile
        # sublane-aligned; >= 8 satisfies the (8, 128) block constraint.
        br = max((target_rows // 32) * 32, 8)

    return pl.pallas_call(
        _cast_f32_kernel,
        out_shape=jax.ShapeDtypeStruct((rows, lane), jnp.float32),
        grid_spec=pltpu.PrefetchScalarGridSpec(
            num_scalar_prefetch=0,
            grid=(pl.cdiv(rows, br),),
            in_specs=[pl.BlockSpec((br, lane), lambda i: (i, 0))],
            out_specs=pl.BlockSpec((br, lane), lambda i: (i, 0)),
        ),
        compiler_params=pltpu.CompilerParams(
            dimension_semantics=("parallel",)
        ),
    )(x2d)


def as_float_tensor(x):
    """Equivalent of `x.type(torch.FloatTensor)` -> float32 array, same shape."""
    orig_shape = x.shape
    n = x.size

    if n == 0:
        return jnp.zeros(orig_shape, dtype=jnp.float32)

    lane, needs_pad = _pick_lane(n)
    x_flat = jnp.reshape(x, (-1,))

    if not needs_pad:
        # Fast path: no pad, no final slice -> no extra HBM passes.
        rows = n // lane
        out2d = _cast_2d(jnp.reshape(x_flat, (rows, lane)))
        return jnp.reshape(out2d, orig_shape)

    # Slow path: pad only to a multiple of 128.
    n_pad = ((n + lane - 1) // lane) * lane
    x_flat = jnp.concatenate(
        [x_flat, jnp.zeros((n_pad - n,), dtype=x.dtype)], axis=0
    )
    rows = n_pad // lane
    out2d = _cast_2d(jnp.reshape(x_flat, (rows, lane)))
    out_flat = jnp.reshape(out2d, (-1,))[:n]
    return jnp.reshape(out_flat, orig_shape)


if __name__ == "__main__":
    key = jax.random.PRNGKey(0)
    # Small NCHW-like input (e.g. a uint8 image batch), matching typical use of
    # AsFloatTensor in a transform pipeline.
    x = jax.random.randint(key, (2, 4, 16, 16), 0, 256, dtype=jnp.int32).astype(
        jnp.uint8
    )

    y = as_float_tensor(x)
    y = jax.block_until_ready(y)

    assert y.shape == x.shape
    assert y.dtype == jnp.float32
    ref = x.astype(jnp.float32)
    assert bool(jnp.all(y == ref))

    # Also exercise the padded (non-multiple-of-128) path.
    x2 = jax.random.randint(key, (3, 5, 7), 0, 256, dtype=jnp.int32).astype(
        jnp.uint8
    )
    y2 = jax.block_until_ready(as_float_tensor(x2))
    assert y2.shape == x2.shape and y2.dtype == jnp.float32
    assert bool(jnp.all(y2 == x2.astype(jnp.float32)))

    print("KERNEL_OK")
</pallas_src>

<mosaic_0001>
module attributes {stable_mosaic.version = 11 : i64} {
  func.func @_cast_f32_kernel(%arg0: i32, %arg1: memref<2x1024xi8, #tpu.memory_space<vmem>>, %arg2: memref<2x1024xf32, #tpu.memory_space<vmem>>) attributes {dimension_semantics = [#tpu.dimension_semantics<parallel>], iteration_bounds = array<i64: 1>, scalar_prefetch = 0 : i64, scratch_operands = 0 : i64, tpu.core_type = #tpu.core_type<tc>, window_params = [{transform_indices = @transform_0, window_bounds = array<i64: 2, 1024>}, {transform_indices = @transform_1, window_bounds = array<i64: 2, 1024>}]} {
    %c0 = arith.constant 0 : index
    %c0_0 = arith.constant 0 : index
    %0 = vector.load %arg1[%c0, %c0_0] : memref<2x1024xi8, #tpu.memory_space<vmem>>, vector<2x1024xi8>
    %1 = arith.uitofp %0 : vector<2x1024xi8> to vector<2x1024xf32>
    %c0_1 = arith.constant 0 : index
    %c0_2 = arith.constant 0 : index
    %2 = vector.load %arg2[%c0_1, %c0_2] : memref<2x1024xf32, #tpu.memory_space<vmem>>, vector<2x1024xf32>
    tpu.vector_store %arg2[%c0_1, %c0_2], %1 {strides = array<i32>} : memref<2x1024xf32, #tpu.memory_space<vmem>>, vector<2x1024xf32>,
    return
  }
  func.func @transform_0(%arg0: i32) -> (i32, i32) {
    %c0_i32 = arith.constant 0 : i32
    %c0_i32_0 = arith.constant 0 : i32
    return %arg0, %c0_i32 : i32, i32
  }
  func.func @transform_1(%arg0: i32) -> (i32, i32) {
    %c0_i32 = arith.constant 0 : i32
    %c0_i32_0 = arith.constant 0 : i32
    return %arg0, %c0_i32 : i32, i32
  }
}

</mosaic_0001>

<llo_original>
// kernel: tpu_custom_call.1
$region0: #{tpu_custom_call.1}
  #allocation0 [shape = 'u32[]', space=smem, size = 0x4, offset = 0x4, fixed_abs, tag = 'smem constant byte address 0x4 - core index']
  #allocation1 [shape = 'u32[144,128]{1,0:T(1,128)}', space=vmem, size = 0x12000, scoped, tag = 'internal scratch']
  %s0 = inlined_call_operand.hbm [shape: u8[2,1024], index: 0, kind: input, shape index: {}]
  %s1 = inlined_call_operand.hbm [shape: f32[2,1024], index: 1, kind: output, shape index: {}]
  %s2 = sld [smem:[#allocation0]]
  $region18: #{tpu_custom_call.1} parent=0
    _
  %s4 = ssub.s32 1, %s2
  %s5 = scalar_select 0, %s4, %s2
  $region1: #{tpu_custom_call.1} parent=0
    #allocation2 [shape = 'u8[4096]{0}', space=vmem, size = 0x1000, scoped, tag = 'input window, operand 0, single buffered']
    #allocation3 [shape = 's32[1]{0}', space=sflag, size = 0x4, scoped, tag = 'scoped memory for tpu_custom_call.1']
    #allocation4 [shape = 's32[1]{0}', space=sflag, size = 0x4, scoped, tag = 'scoped memory for tpu_custom_call.1']
    #allocation5 [shape = 'u8[8192]{0}', space=vmem, size = 0x2000, scoped, tag = 'output window, operand 0, single buffered']
    %6 = vsyncpa [#allocation3], 0
    %7 = vsyncpa [#allocation4], 0
    // Predicated region
    $region2: #{tpu_custom_call.1} parent=1 // pred_check
      _
    $region3: #{tpu_custom_call.1} parent=1 // pred_check_branch
      %9 = sbr.rel (0) target = $region5
    $region4: #{tpu_custom_call.1} parent=1 // pred_region
      %s11 = ssub.s32 128, 128
      %12 = vsyncadd [#allocation3], %s11
      %s14 = sshll.u32 [#allocation2], 4
      %s15 = int_to_ptr.vmem [resolvable:$true] %s14
      %17 = dma.hbm_to_vmem [thread:$0]  %s0, 128, %s15, [#allocation3]
    $region5: #{tpu_custom_call.1} parent=1 // pred_fallthru
      _
    // Predicated region
    $region6: #{tpu_custom_call.1} parent=1 // pred_check
      _
    $region7: #{tpu_custom_call.1} parent=1 // pred_check_branch
      %19 = sbr.rel (0) target = $region9
    $region8: #{tpu_custom_call.1} parent=1 // pred_region
      %20 = dma.done [#allocation3], 128
    $region9: #{tpu_custom_call.1} parent=1 // pred_fallthru
      _
    %v21 = vld [vmem:[#allocation2] sm:$0xff]
    %v22 = vunpack.c.0.s8 %v21
    %v23 = vunpack.c.1.s8 %v21
    %v24 = vunpack.c.2.s8 %v21
    %v25 = vunpack.c.3.s8 %v21
    %v26 = vand.u32 %v22, 255
    %v27 = vand.u32 %v23, 255
    %v28 = vand.u32 %v24, 255
    %v29 = vand.u32 %v25, 255
    %v30 = vcvt.s32.f32 %v26
    %v31 = vcvt.s32.f32 %v27
    %v32 = vcvt.s32.f32 %v28
    %v33 = vcvt.s32.f32 %v29
    %v39 = vunpack.c.l.s4 1983009808
    %v40 = vunpack.c.0.s8 %v39
    %v41 = vlaneseq
    %v42 = vshrl.u32 %v41, 7
    %v43 = vsub.s32 %v40, %v42
    %v44 = vrot.slane %v30, %v43
    %v46 = vunpack.c.l.s4 1983009808
    %v47 = vunpack.c.0.s8 %v46
    %v48 = vlaneseq
    %v49 = vshrl.u32 %v48, 7
    %v50 = vsub.s32 %v47, %v49
    %v51 = vrot.slane %v31, %v50
    %v52 = vcombine.low %v44, %v51
    %v54 = vunpack.c.l.s4 1983009808
    %v55 = vunpack.c.0.s8 %v54
    %v56 = vlaneseq
    %v57 = vshrl.u32 %v56, 7
    %v58 = vsub.s32 %v55, %v57
    %v59 = vrot.slane %v32, %v58
    %v61 = vunpack.c.l.s4 1983009808
    %v62 = vunpack.c.0.s8 %v61
    %v63 = vlaneseq
    %v64 = vshrl.u32 %v63, 7
    %v65 = vsub.s32 %v62, %v64
    %v66 = vrot.slane %v33, %v65
    %v67 = vcombine.low %v59, %v66
    %70 = vst [vmem:[#allocation5] sm:$0xff] %v52
    %71 = vst [vmem:[#allocation5 + $0x8] sm:$0xff] %v67
    // Predicated region
    $region10: #{tpu_custom_call.1} parent=1 // pred_check
      _
    $region11: #{tpu_custom_call.1} parent=1 // pred_check_branch
      %73 = sbr.rel (0) target = $region13
    $region12: #{tpu_custom_call.1} parent=1 // pred_region
      %s75 = ssub.s32 256, 256
      %76 = vsyncadd [#allocation4], %s75
      %s78 = sshll.u32 [#allocation5], 4
      %s79 = int_to_ptr.vmem [resolvable:$true] %s78
      %81 = dma.vmem_to_hbm [thread:$0]  %s79, 256, %s1, [#allocation4]
    $region13: #{tpu_custom_call.1} parent=1 // pred_fallthru
      _
    // Predicated region
    $region14: #{tpu_custom_call.1} parent=1 // pred_check
      _
    $region15: #{tpu_custom_call.1} parent=1 // pred_check_branch
      %83 = sbr.rel (0) target = $region17
    $region16: #{tpu_custom_call.1} parent=1 // pred_region
      %84 = dma.done [#allocation4], 256
    $region17: #{tpu_custom_call.1} parent=1 // pred_fallthru
      _
    %85 = vsyncpa [#allocation3], 1
    %86 = vsyncpa [#allocation4], 1

</llo_original>
